<compile_context>
chip_gen: v6e
topology: v6e:2x2x1
jax: 0.10.0
libtpu: 0.0.40
codegen_flags: <defaults>
</compile_context>

<pallas_src>
import jax
import jax.numpy as jnp
from jax.experimental import pallas as pl
from jax.experimental.pallas import tpu as pltpu

STATE_DIM = 2     # MountainCarContinuous-v0 observation_space.shape[0]
ACTION_DIM = 1    # MountainCarContinuous-v0 action_space.shape[0]
HIDDEN_DIM = 256

_BATCH_TILE = 512  # rows per grid step (multiple of 8); sized for 64 MiB VMEM


def _round_up(x, m):
    return (x + m - 1) // m * m


def _critic_kernel(state_ref, act_ref, w1s_ref, w1a_ref, b1_ref,
                   w2_ref, b2_ref, w3_ref, b3_ref, out_ref):
    """One (critic q, batch tile) step: fc1(VPU FMA) -> relu -> fc2(MXU) ->
    relu -> fc3(lane reduction + SMEM scalar bias)."""
    s = state_ref[...]                                # (TB, S)
    a = act_ref[...]                                  # (TB, A)
    w1s = w1s_ref[...]                                # (S, H)
    w1a = w1a_ref[...]                                # (A, H)

    # fc1: K = S + A = 3 -> keep it off the MXU, unroll as broadcast FMAs.
    h1 = b1_ref[...]                                  # (1, H) -> broadcasts
    for i in range(s.shape[1]):
        h1 = h1 + s[:, i:i + 1] * w1s[i:i + 1, :]
    for j in range(a.shape[1]):
        h1 = h1 + a[:, j:j + 1] * w1a[j:j + 1, :]
    h1 = jnp.maximum(h1, 0.0)                         # (TB, H)

    # fc2: the only real matmul -> MXU.
    h2 = jnp.dot(h1, w2_ref[...], preferred_element_type=jnp.float32)
    h2 = jnp.maximum(h2 + b2_ref[...], 0.0)           # (TB, H)

    # fc3: N = 1 -> elementwise mul + cross-lane reduction instead of an MXU
    # matmul that would use 1/128 of the output lanes.
    v = jnp.sum(h2 * w3_ref[...], axis=-1, keepdims=True)   # (TB, 1)
    v = v + b3_ref[pl.program_id(0)]                  # scalar bias from SMEM
    out_ref[...] = v.astype(out_ref.dtype)


def _stacked_critic_pallas(state, action, w1s, w1a, b1, w2, b2, w3, b3):
    """Evaluate Q stacked critics in one pallas_call.

    state: (B, S), action: (B, A); stacked params carry a leading Q axis.
    Returns (Q, B, 1) float32.
    """
    num_q, s_dim, hidden = w1s.shape
    a_dim = w1a.shape[1]
    batch = state.shape[0]

    # Batch tile: multiple of 8 (f32 sublane), capped so VMEM stays small.
    tb = min(_BATCH_TILE, _round_up(batch, 8))
    b_pad = _round_up(batch, tb)
    if b_pad != batch:
        state = jnp.pad(state, ((0, b_pad - batch), (0, 0)))
        action = jnp.pad(action, ((0, b_pad - batch), (0, 0)))
    grid = (num_q, b_pad // tb)

    flops = num_q * b_pad * (2 * (s_dim + a_dim) * hidden
                             + 2 * hidden * hidden + 2 * hidden)
    bytes_accessed = 4 * (state.size + action.size + w1s.size + w1a.size
                          + b1.size + w2.size + b2.size + w3.size + b3.size
                          + num_q * b_pad)

    out = pl.pallas_call(
        _critic_kernel,
        out_shape=jax.ShapeDtypeStruct((num_q, b_pad, 1), jnp.float32),
        grid=grid,
        in_specs=[
            # Activations: tiled over the batch axis only.
            pl.BlockSpec((tb, s_dim), lambda q, b: (b, 0)),
            pl.BlockSpec((tb, a_dim), lambda q, b: (b, 0)),
            # Weights/biases: selected by critic index q, constant over batch
            # tiles so they stay resident in VMEM.
            pl.BlockSpec((None, s_dim, hidden), lambda q, b: (q, 0, 0)),
            pl.BlockSpec((None, a_dim, hidden), lambda q, b: (q, 0, 0)),
            pl.BlockSpec((None, 1, hidden), lambda q, b: (q, 0, 0)),
            pl.BlockSpec((None, hidden, hidden), lambda q, b: (q, 0, 0)),
            pl.BlockSpec((None, 1, hidden), lambda q, b: (q, 0, 0)),
            pl.BlockSpec((None, 1, hidden), lambda q, b: (q, 0, 0)),
            # fc3 bias: Q scalars in SMEM (avoid a padded (8,128) VMEM tile).
            pl.BlockSpec(memory_space=pltpu.MemorySpace.SMEM),
        ],
        out_specs=pl.BlockSpec((None, tb, 1), lambda q, b: (q, b, 0)),
        compiler_params=pltpu.CompilerParams(
            dimension_semantics=("parallel", "parallel"),
            vmem_limit_bytes=32 << 20),
        cost_estimate=pl.CostEstimate(
            flops=flops, transcendentals=0, bytes_accessed=bytes_accessed),
    )(state, action, w1s, w1a, b1, w2, b2, w3, b3)

    return out[:, :batch, :]


@jax.jit
def critic_forward(state, action, params):
    """Single critic: state (B, S), action (B, A) -> value (B, 1)."""
    stacked = tuple(p[None] for p in params)          # Q = 1
    return _stacked_critic_pallas(state, action, *stacked)[0]


@jax.jit
def twin_critic_forward(state, action, params_q1, params_q2):
    """TD3 twin critics evaluated in ONE pallas_call -> (q1, q2), each (B, 1)."""
    stacked = tuple(jnp.stack(pair) for pair in zip(params_q1, params_q2))
    out = _stacked_critic_pallas(state, action, *stacked)
    return out[0], out[1]


def init_critic_params(key, state_dim=STATE_DIM, action_dim=ACTION_DIM,
                       hidden_dim=HIDDEN_DIM):
    """nn.Linear-style U(-1/sqrt(fan_in), 1/sqrt(fan_in)) init.

    Kernel-friendly layout:
      w1s: (state_dim, H)   fc1 weight rows acting on the state features
      w1a: (action_dim, H)  fc1 weight rows acting on the action features
      b1:  (1, H)
      w2:  (H, H)           y = x @ w2  (transposed vs. torch)
      b2:  (1, H)
      w3:  (1, H)           fc3 weight as a row (fc3 is a lane reduction)
      b3:  ()               scalar, placed in SMEM inside the kernel
    """
    in_dim = state_dim + action_dim
    k = jax.random.split(key, 6)

    def uni(kk, shape, fan_in):
        bound = 1.0 / float(fan_in) ** 0.5
        return jax.random.uniform(kk, shape, jnp.float32, -bound, bound)

    w1 = uni(k[0], (in_dim, hidden_dim), in_dim)
    w1s, w1a = w1[:state_dim], w1[state_dim:]
    b1 = uni(k[1], (1, hidden_dim), in_dim)
    w2 = uni(k[2], (hidden_dim, hidden_dim), hidden_dim)
    b2 = uni(k[3], (1, hidden_dim), hidden_dim)
    w3 = uni(k[4], (1, hidden_dim), hidden_dim)
    b3 = uni(k[5], (), hidden_dim)
    return (w1s, w1a, b1, w2, b2, w3, b3)


def _reference_forward(state, action, params):
    """Pure-JAX reference (same math as the PyTorch module)."""
    w1s, w1a, b1, w2, b2, w3, b3 = params
    h1 = jnp.maximum(state @ w1s + action @ w1a + b1, 0.0)
    h2 = jnp.maximum(h1 @ w2 + b2, 0.0)
    return jnp.sum(h2 * w3, axis=-1, keepdims=True) + b3


if __name__ == "__main__":
    key = jax.random.PRNGKey(0)
    kp1, kp2, ks, ka = jax.random.split(key, 4)

    batch = 8
    params1 = init_critic_params(kp1)
    params2 = init_critic_params(kp2)
    state = jax.random.normal(ks, (batch, STATE_DIM), jnp.float32)
    action = jax.random.normal(ka, (batch, ACTION_DIM), jnp.float32)

    # Single critic.
    value = jax.block_until_ready(critic_forward(state, action, params1))
    ref = _reference_forward(state, action, params1)
    assert value.shape == (batch, 1), value.shape
    assert jnp.allclose(value, ref, atol=1e-4, rtol=1e-5), "single critic mismatch"

    # TD3 twin critics fused into one pallas_call.
    q1, q2 = jax.block_until_ready(
        twin_critic_forward(state, action, params1, params2))
    assert jnp.allclose(q1, _reference_forward(state, action, params1),
                        atol=1e-4, rtol=1e-5), "twin critic q1 mismatch"
    assert jnp.allclose(q2, _reference_forward(state, action, params2),
                        atol=1e-4, rtol=1e-5), "twin critic q2 mismatch"

    # Ragged batch (not a multiple of the 8-row sublane) exercises the padding
    # + slicing path.
    batch2 = 13
    ks2, ka2 = jax.random.split(jax.random.PRNGKey(1))
    state2 = jax.random.normal(ks2, (batch2, STATE_DIM), jnp.float32)
    action2 = jax.random.normal(ka2, (batch2, ACTION_DIM), jnp.float32)
    value2 = jax.block_until_ready(critic_forward(state2, action2, params1))
    assert value2.shape == (batch2, 1), value2.shape
    assert jnp.allclose(value2, _reference_forward(state2, action2, params1),
                        atol=1e-4, rtol=1e-5), "ragged batch mismatch"

    print("KERNEL_OK")
</pallas_src>

<mosaic_0001>
module attributes {stable_mosaic.version = 11 : i64} {
  func.func @_critic_kernel(%arg0: i32, %arg1: i32, %arg2: memref<8x2xf32, #tpu.memory_space<vmem>>, %arg3: memref<8x1xf32, #tpu.memory_space<vmem>>, %arg4: memref<1x2x256xf32, #tpu.memory_space<vmem>>, %arg5: memref<1x1x256xf32, #tpu.memory_space<vmem>>, %arg6: memref<1x1x256xf32, #tpu.memory_space<vmem>>, %arg7: memref<1x256x256xf32, #tpu.memory_space<vmem>>, %arg8: memref<1x1x256xf32, #tpu.memory_space<vmem>>, %arg9: memref<1x1x256xf32, #tpu.memory_space<vmem>>, %arg10: memref<1xf32, #tpu.memory_space<smem>>, %arg11: memref<1x8x1xf32, #tpu.memory_space<vmem>>) attributes {dimension_semantics = [#tpu.dimension_semantics<parallel>, #tpu.dimension_semantics<parallel>], iteration_bounds = array<i64: 1, 1>, scalar_prefetch = 0 : i64, scratch_operands = 0 : i64, tpu.core_type = #tpu.core_type<tc>, window_params = [{transform_indices = @transform_0, window_bounds = array<i64: 8, 2>}, {transform_indices = @transform_1, window_bounds = array<i64: 8, 1>}, {transform_indices = @transform_2, window_bounds = array<i64: 1, 2, 256>}, {transform_indices = @transform_3, window_bounds = array<i64: 1, 1, 256>}, {transform_indices = @transform_4, window_bounds = array<i64: 1, 1, 256>}, {transform_indices = @transform_5, window_bounds = array<i64: 1, 256, 256>}, {transform_indices = @transform_6, window_bounds = array<i64: 1, 1, 256>}, {transform_indices = @transform_7, window_bounds = array<i64: 1, 1, 256>}, {transform_indices = @transform_8, window_bounds = array<i64: 1>}, {transform_indices = @transform_9, window_bounds = array<i64: 1, 8, 1>}]} {
    %c0 = arith.constant 0 : index
    %c0_0 = arith.constant 0 : index
    %0 = vector.load %arg2[%c0, %c0_0] : memref<8x2xf32, #tpu.memory_space<vmem>>, vector<8x2xf32>
    %c0_1 = arith.constant 0 : index
    %c0_2 = arith.constant 0 : index
    %1 = vector.load %arg3[%c0_1, %c0_2] : memref<8x1xf32, #tpu.memory_space<vmem>>, vector<8x1xf32>
    %c0_3 = arith.constant 0 : index
    %c0_4 = arith.constant 0 : index
    %c0_5 = arith.constant 0 : index
    %2 = vector.load %arg4[%c0_3, %c0_4, %c0_5] : memref<1x2x256xf32, #tpu.memory_space<vmem>>, vector<1x2x256xf32>
    %3 = vector.shape_cast %2 : vector<1x2x256xf32> to vector<2x256xf32>
    %c0_6 = arith.constant 0 : index
    %c0_7 = arith.constant 0 : index
    %c0_8 = arith.constant 0 : index
    %4 = vector.load %arg5[%c0_6, %c0_7, %c0_8] : memref<1x1x256xf32, #tpu.memory_space<vmem>>, vector<1x1x256xf32>
    %5 = vector.shape_cast %4 : vector<1x1x256xf32> to vector<1x256xf32>
    %c0_9 = arith.constant 0 : index
    %c0_10 = arith.constant 0 : index
    %c0_11 = arith.constant 0 : index
    %6 = vector.load %arg6[%c0_9, %c0_10, %c0_11] : memref<1x1x256xf32, #tpu.memory_space<vmem>>, vector<1x1x256xf32>
    %7 = vector.shape_cast %6 : vector<1x1x256xf32> to vector<1x256xf32>
    %8 = vector.extract_strided_slice %0 {offsets = [0, 0], sizes = [8, 1], strides = [1, 1]} : vector<8x2xf32> to vector<8x1xf32>
    %9 = vector.extract_strided_slice %3 {offsets = [0, 0], sizes = [1, 256], strides = [1, 1]} : vector<2x256xf32> to vector<1x256xf32>
    %10 = vector.broadcast %8 : vector<8x1xf32> to vector<8x256xf32>
    %11 = vector.broadcast %9 : vector<1x256xf32> to vector<8x256xf32>
    %12 = arith.mulf %10, %11 : vector<8x256xf32>
    %13 = vector.broadcast %7 : vector<1x256xf32> to vector<8x256xf32>
    %14 = arith.addf %13, %12 : vector<8x256xf32>
    %15 = vector.extract_strided_slice %0 {offsets = [0, 1], sizes = [8, 1], strides = [1, 1]} : vector<8x2xf32> to vector<8x1xf32>
    %16 = vector.extract_strided_slice %3 {offsets = [1, 0], sizes = [1, 256], strides = [1, 1]} : vector<2x256xf32> to vector<1x256xf32>
    %17 = vector.broadcast %15 : vector<8x1xf32> to vector<8x256xf32>
    %18 = vector.broadcast %16 : vector<1x256xf32> to vector<8x256xf32>
    %19 = arith.mulf %17, %18 : vector<8x256xf32>
    %20 = arith.addf %14, %19 : vector<8x256xf32>
    %21 = vector.broadcast %1 : vector<8x1xf32> to vector<8x256xf32>
    %22 = vector.broadcast %5 : vector<1x256xf32> to vector<8x256xf32>
    %23 = arith.mulf %21, %22 : vector<8x256xf32>
    %24 = arith.addf %20, %23 : vector<8x256xf32>
    %cst = arith.constant 0.000000e+00 : f32
    %25 = vector.broadcast %cst : f32 to vector<8x256xf32>
    %26 = arith.maximumf %24, %25 : vector<8x256xf32>
    %c0_12 = arith.constant 0 : index
    %c0_13 = arith.constant 0 : index
    %c0_14 = arith.constant 0 : index
    %27 = vector.load %arg7[%c0_12, %c0_13, %c0_14] : memref<1x256x256xf32, #tpu.memory_space<vmem>>, vector<1x256x256xf32>
    %28 = vector.shape_cast %27 : vector<1x256x256xf32> to vector<256x256xf32>
    %cst_15 = arith.constant dense<0.000000e+00> : vector<8x256xf32>
    %29 = tpu.matmul %26, %28, %cst_15 {dimension_numbers = #tpu.dot_dimension_numbers<[1], [0], [0], [1], [0, 0, 1, 1], [], []>} : vector<8x256xf32>, vector<256x256xf32>, vector<8x256xf32> -> vector<8x256xf32>
    %c0_16 = arith.constant 0 : index
    %c0_17 = arith.constant 0 : index
    %c0_18 = arith.constant 0 : index
    %30 = vector.load %arg8[%c0_16, %c0_17, %c0_18] : memref<1x1x256xf32, #tpu.memory_space<vmem>>, vector<1x1x256xf32>
    %31 = vector.shape_cast %30 : vector<1x1x256xf32> to vector<1x256xf32>
    %32 = vector.broadcast %31 : vector<1x256xf32> to vector<8x256xf32>
    %33 = arith.addf %29, %32 : vector<8x256xf32>
    %cst_19 = arith.constant 0.000000e+00 : f32
    %34 = vector.broadcast %cst_19 : f32 to vector<8x256xf32>
    %35 = arith.maximumf %33, %34 : vector<8x256xf32>
    %c0_20 = arith.constant 0 : index
    %c0_21 = arith.constant 0 : index
    %c0_22 = arith.constant 0 : index
    %36 = vector.load %arg9[%c0_20, %c0_21, %c0_22] : memref<1x1x256xf32, #tpu.memory_space<vmem>>, vector<1x1x256xf32>
    %37 = vector.shape_cast %36 : vector<1x1x256xf32> to vector<1x256xf32>
    %38 = vector.broadcast %37 : vector<1x256xf32> to vector<8x256xf32>
    %39 = arith.mulf %35, %38 : vector<8x256xf32>
    %cst_23 = arith.constant dense<0.000000e+00> : vector<8xf32>
    %40 = vector.multi_reduction <add>, %39, %cst_23 [1] : vector<8x256xf32> to vector<8xf32>
    %41 = vector.shape_cast %40 : vector<8xf32> to vector<8x1xf32>
    %42 = arith.index_cast %arg0 : i32 to index
    %43 = memref.load %arg10[%42] : memref<1xf32, #tpu.memory_space<smem>>
    %44 = vector.broadcast %43 : f32 to vector<8x1xf32>
    %45 = arith.addf %41, %44 : vector<8x1xf32>
    %c0_24 = arith.constant 0 : index
    %c0_25 = arith.constant 0 : index
    %c0_26 = arith.constant 0 : index
    %46 = vector.load %arg11[%c0_24, %c0_25, %c0_26] : memref<1x8x1xf32, #tpu.memory_space<vmem>>, vector<1x8x1xf32>
    %47 = vector.shape_cast %46 : vector<1x8x1xf32> to vector<8x1xf32>
    %48 = vector.shape_cast %45 : vector<8x1xf32> to vector<1x8x1xf32>
    tpu.vector_store %arg11[%c0_24, %c0_25, %c0_26], %48 {strides = array<i32>} : memref<1x8x1xf32, #tpu.memory_space<vmem>>, vector<1x8x1xf32>,
    return
  }
  func.func @transform_0(%arg0: i32, %arg1: i32) -> (i32, i32) {
    %c0_i32 = arith.constant 0 : i32
    %c0_i32_0 = arith.constant 0 : i32
    return %arg1, %c0_i32 : i32, i32
  }
  func.func @transform_1(%arg0: i32, %arg1: i32) -> (i32, i32) {
    %c0_i32 = arith.constant 0 : i32
    %c0_i32_0 = arith.constant 0 : i32
    return %arg1, %c0_i32 : i32, i32
  }
  func.func @transform_2(%arg0: i32, %arg1: i32) -> (i32, i32, i32) {
    %c0_i32 = arith.constant 0 : i32
    %c0_i32_0 = arith.constant 0 : i32
    %c0_i32_1 = arith.constant 0 : i32
    return %arg0, %c0_i32, %c0_i32_0 : i32, i32, i32
  }
  func.func @transform_3(%arg0: i32, %arg1: i32) -> (i32, i32, i32) {
    %c0_i32 = arith.constant 0 : i32
    %c0_i32_0 = arith.constant 0 : i32
    %c0_i32_1 = arith.constant 0 : i32
    return %arg0, %c0_i32, %c0_i32_0 : i32, i32, i32
  }
  func.func @transform_4(%arg0: i32, %arg1: i32) -> (i32, i32, i32) {
    %c0_i32 = arith.constant 0 : i32
    %c0_i32_0 = arith.constant 0 : i32
    %c0_i32_1 = arith.constant 0 : i32
    return %arg0, %c0_i32, %c0_i32_0 : i32, i32, i32
  }
  func.func @transform_5(%arg0: i32, %arg1: i32) -> (i32, i32, i32) {
    %c0_i32 = arith.constant 0 : i32
    %c0_i32_0 = arith.constant 0 : i32
    %c0_i32_1 = arith.constant 0 : i32
    return %arg0, %c0_i32, %c0_i32_0 : i32, i32, i32
  }
  func.func @transform_6(%arg0: i32, %arg1: i32) -> (i32, i32, i32) {
    %c0_i32 = arith.constant 0 : i32
    %c0_i32_0 = arith.constant 0 : i32
    %c0_i32_1 = arith.constant 0 : i32
    return %arg0, %c0_i32, %c0_i32_0 : i32, i32, i32
  }
  func.func @transform_7(%arg0: i32, %arg1: i32) -> (i32, i32, i32) {
    %c0_i32 = arith.constant 0 : i32
    %c0_i32_0 = arith.constant 0 : i32
    %c0_i32_1 = arith.constant 0 : i32
    return %arg0, %c0_i32, %c0_i32_0 : i32, i32, i32
  }
  func.func @transform_8(%arg0: i32, %arg1: i32) -> i32 {
    %c0_i32 = arith.constant 0 : i32
    %c0_i32_0 = arith.constant 0 : i32
    return %c0_i32 : i32
  }
  func.func @transform_9(%arg0: i32, %arg1: i32) -> (i32, i32, i32) {
    %c0_i32 = arith.constant 0 : i32
    %c0_i32_0 = arith.constant 0 : i32
    return %arg0, %arg1, %c0_i32 : i32, i32, i32
  }
}

</mosaic_0001>

<llo_original>
// kernel: critic_forward.1
$region0: #{critic_forward.1}
  #allocation0 [shape = 'u32[]', space=smem, size = 0x4, offset = 0x4, fixed_abs, tag = 'smem constant byte address 0x4 - core index']
  #allocation1 [shape = 'u32[144,128]{1,0:T(1,128)}', space=vmem, size = 0x12000, scoped, tag = 'internal scratch']
  #allocation2 [shape = 'f32[1]{0:T(128)S(6)}', space=smem, size = 0x200, scoped, tag = 'scoped memory for critic_forward.1']
  %s0 = inlined_call_operand.vmem [shape: f32[8,2], index: 0, kind: input, shape index: {}]
  %s1 = inlined_call_operand.vmem [shape: f32[8,1], index: 1, kind: input, shape index: {}]
  %s2 = inlined_call_operand.vmem [shape: f32[1,2,256], index: 2, kind: input, shape index: {}]
  %s3 = inlined_call_operand.vmem [shape: f32[1,1,256], index: 3, kind: input, shape index: {}]
  %s4 = inlined_call_operand.vmem [shape: f32[1,1,256], index: 4, kind: input, shape index: {}]
  %s5 = inlined_call_operand.hbm [shape: f32[1,256,256], index: 5, kind: input, shape index: {}]
  %s6 = inlined_call_operand.vmem [shape: f32[1,1,256], index: 6, kind: input, shape index: {}]
  %s7 = inlined_call_operand.vmem [shape: f32[1,1,256], index: 7, kind: input, shape index: {}]
  %s8 = inlined_call_operand.<no memory space> [shape: f32[1], index: 8, kind: input, shape index: {}]
  %s9 = inlined_call_operand.vmem [shape: f32[1,8,1], index: 9, kind: output, shape index: {}]
  %s10 = sld [smem:[#allocation0]]
  $region50: #{critic_forward.1} parent=0
    _
  %s12 = ssub.s32 1, %s10
  %s13 = scalar_select 0, %s12, %s10
  %14 = sst [smem:[#allocation2]] %s8
  $region1: #{critic_forward.1} parent=0
    #allocation3 [shape = 'u8[262144]{0}', space=vmem, size = 0x40000, scoped, tag = 'input window, operand 5, single buffered']
    #allocation4 [shape = 's32[1]{0}', space=sflag, size = 0x4, scoped, tag = 'scoped memory for critic_forward.1']
    %15 = vsyncpa [#allocation4], 0
    // Predicated region
    $region2: #{critic_forward.1} parent=1 // pred_check
      _
    $region3: #{critic_forward.1} parent=1 // pred_check_branch
      %17 = sbr.rel (0) target = $region5
    $region4: #{critic_forward.1} parent=1 // pred_region
      _
    $region5: #{critic_forward.1} parent=1 // pred_fallthru
      _
    // Predicated region
    $region6: #{critic_forward.1} parent=1 // pred_check
      _
    $region7: #{critic_forward.1} parent=1 // pred_check_branch
      %19 = sbr.rel (0) target = $region9
    $region8: #{critic_forward.1} parent=1 // pred_region
      _
    $region9: #{critic_forward.1} parent=1 // pred_fallthru
      _
    // Predicated region
    $region10: #{critic_forward.1} parent=1 // pred_check
      _
    $region11: #{critic_forward.1} parent=1 // pred_check_branch
      %21 = sbr.rel (0) target = $region13
    $region12: #{critic_forward.1} parent=1 // pred_region
      _
    $region13: #{critic_forward.1} parent=1 // pred_fallthru
      _
    // Predicated region
    $region14: #{critic_forward.1} parent=1 // pred_check
      _
    $region15: #{critic_forward.1} parent=1 // pred_check_branch
      %23 = sbr.rel (0) target = $region17
    $region16: #{critic_forward.1} parent=1 // pred_region
      _
    $region17: #{critic_forward.1} parent=1 // pred_fallthru
      _
    // Predicated region
    $region18: #{critic_forward.1} parent=1 // pred_check
      _
    $region19: #{critic_forward.1} parent=1 // pred_check_branch
      %25 = sbr.rel (0) target = $region21
    $region20: #{critic_forward.1} parent=1 // pred_region
      _
    $region21: #{critic_forward.1} parent=1 // pred_fallthru
      _
    // Predicated region
    $region22: #{critic_forward.1} parent=1 // pred_check
      _
    $region23: #{critic_forward.1} parent=1 // pred_check_branch
      %27 = sbr.rel (0) target = $region25
    $region24: #{critic_forward.1} parent=1 // pred_region
      %s29 = ssub.s32 8192, 8192
      %30 = vsyncadd [#allocation4], %s29
      %s31 = sshll.u32 [#allocation3], 4
      %s32 = int_to_ptr.vmem [resolvable:$true] %s31
      %37 = dma.hbm_to_vmem [thread:$0]  %s5, 8192, %s32, [#allocation4], 256, 256, 16
    $region25: #{critic_forward.1} parent=1 // pred_fallthru
      _
    // Predicated region
    $region26: #{critic_forward.1} parent=1 // pred_check
      _
    $region27: #{critic_forward.1} parent=1 // pred_check_branch
      %39 = sbr.rel (0) target = $region29
    $region28: #{critic_forward.1} parent=1 // pred_region
      _
    $region29: #{critic_forward.1} parent=1 // pred_fallthru
      _
    // Predicated region
    $region30: #{critic_forward.1} parent=1 // pred_check
      _
    $region31: #{critic_forward.1} parent=1 // pred_check_branch
      %41 = sbr.rel (0) target = $region33
    $region32: #{critic_forward.1} parent=1 // pred_region
      _
    $region33: #{critic_forward.1} parent=1 // pred_fallthru
      _
    // Predicated region
    $region34: #{critic_forward.1} parent=1 // pred_check
      _
    $region35: #{critic_forward.1} parent=1 // pred_check_branch
      %43 = sbr.rel (0) target = $region37
    $region36: #{critic_forward.1} parent=1 // pred_region
      _
    $region37: #{critic_forward.1} parent=1 // pred_fallthru
      _
    // Predicated region
    $region38: #{critic_forward.1} parent=1 // pred_check
      _
    $region39: #{critic_forward.1} parent=1 // pred_check_branch
      %45 = sbr.rel (0) target = $region41
    $region40: #{critic_forward.1} parent=1 // pred_region
      %46 = dma.done [#allocation4], 8192
    $region41: #{critic_forward.1} parent=1 // pred_fallthru
      _
    %v47 = vld [vmem:[%s0] sm:$0xff]
    %v48 = vld [vmem:[%s1] sm:$0xff]
    %v49 = vld [vmem:[%s2] sm:$0xf]
    %v50 = vld [vmem:[%s3] sm:$0x3]
    %v51 = vld [vmem:[%s4] sm:$0x3]
    %53 = vset.pattern.permute.xlu0 0
    %54 = vperm.xlu0 %53, %v47
    %v55 = vpop.permute.xlu0 %54
    %v58 = vlaneseq
    %v59 = vshrl.u32 %v58, 7
    %v60 = vsub.s32 0, %v59
    %v61 = vrot.slane %v49, %v60
    %v62 = vlaneseq
    %v63 = vshrl.u32 %v62, 7
    %v64 = vsub.s32 2, %v63
    %v65 = vrot.slane %v49, %v64
    %v68 = vlaneseq
    %v69 = vshrl.u32 %v68, 7
    %v70 = vsub.s32 0, %v69
    %v71 = vrot.slane %v61, %v70
    %v72 = vlaneseq
    %v73 = vshrl.u32 %v72, 7
    %v74 = vsub.s32 0, %v73
    %v75 = vrot.slane %v65, %v74
    %v76 = vmul.f32 %v55, %v71
    %v77 = vmul.f32 %v55, %v75
    %v79 = vlaneseq
    %v80 = vshrl.u32 %v79, 7
    %v81 = vsub.s32 0, %v80
    %v82 = vrot.slane %v51, %v81
    %v83 = vlaneseq
    %v84 = vshrl.u32 %v83, 7
    %v85 = vsub.s32 1, %v84
    %v86 = vrot.slane %v51, %v85
    %v89 = vadd.f32 %v82, %v76
    %v90 = vadd.f32 %v86, %v77
    %91 = vset.pattern.permute.xlu0 1
    %92 = vperm.xlu0 %91, %v47
    %v93 = vpop.permute.xlu0 %92
    %v95 = vlaneseq
    %v96 = vshrl.u32 %v95, 7
    %v97 = vsub.s32 1, %v96
    %v98 = vrot.slane %v49, %v97
    %v99 = vlaneseq
    %v100 = vshrl.u32 %v99, 7
    %v101 = vsub.s32 3, %v100
    %v102 = vrot.slane %v49, %v101
    %v105 = vlaneseq
    %v106 = vshrl.u32 %v105, 7
    %v107 = vsub.s32 1, %v106
    %v108 = vrot.slane %v98, %v107
    %v109 = vlaneseq
    %v110 = vshrl.u32 %v109, 7
    %v111 = vsub.s32 1, %v110
    %v112 = vrot.slane %v102, %v111
    %v113 = vmul.f32 %v93, %v108
    %v114 = vmul.f32 %v93, %v112
    %v115 = vadd.f32 %v89, %v113
    %v116 = vadd.f32 %v90, %v114
    %118 = vset.pattern.permute.xlu0 0
    %119 = vperm.xlu0 %118, %v48
    %v120 = vpop.permute.xlu0 %119
    %v123 = vlaneseq
    %v124 = vshrl.u32 %v123, 7
    %v125 = vsub.s32 0, %v124
    %v126 = vrot.slane %v50, %v125
    %v127 = vlaneseq
    %v128 = vshrl.u32 %v127, 7
    %v129 = vsub.s32 1, %v128
    %v130 = vrot.slane %v50, %v129
    %v133 = vmul.f32 %v120, %v126
    %v134 = vmul.f32 %v120, %v130
    %v135 = vadd.f32 %v115, %v133
    %v136 = vadd.f32 %v116, %v134
    %v137 = vmax.f32 %v135, 0.0
    %v138 = vmax.f32 %v136, 0.0
    %v139 = vld [vmem:[#allocation3] sm:$0xff]
    %v140 = vld [vmem:[#allocation3 + $0x8] sm:$0xff]
    %v141 = vld [vmem:[#allocation3 + $0x10] sm:$0xff]
    %v142 = vld [vmem:[#allocation3 + $0x18] sm:$0xff]
    %v143 = vld [vmem:[#allocation3 + $0x20] sm:$0xff]
    %v144 = vld [vmem:[#allocation3 + $0x28] sm:$0xff]
    %v145 = vld [vmem:[#allocation3 + $0x30] sm:$0xff]
    %v146 = vld [vmem:[#allocation3 + $0x38] sm:$0xff]
    %v147 = vld [vmem:[#allocation3 + $0x40] sm:$0xff]
    %v148 = vld [vmem:[#allocation3 + $0x48] sm:$0xff]
    %v149 = vld [vmem:[#allocation3 + $0x50] sm:$0xff]
    %v150 = vld [vmem:[#allocation3 + $0x58] sm:$0xff]
    %v151 = vld [vmem:[#allocation3 + $0x60] sm:$0xff]
    %v152 = vld [vmem:[#allocation3 + $0x68] sm:$0xff]
    %v153 = vld [vmem:[#allocation3 + $0x70] sm:$0xff]
    %v154 = vld [vmem:[#allocation3 + $0x78] sm:$0xff]
    %v155 = vld [vmem:[#allocation3 + $0x80] sm:$0xff]
    %v156 = vld [vmem:[#allocation3 + $0x88] sm:$0xff]
    %v157 = vld [vmem:[#allocation3 + $0x90] sm:$0xff]
    %v158 = vld [vmem:[#allocation3 + $0x98] sm:$0xff]
    %v159 = vld [vmem:[#allocation3 + $0xa0] sm:$0xff]
    %v160 = vld [vmem:[#allocation3 + $0xa8] sm:$0xff]
    %v161 = vld [vmem:[#allocation3 + $0xb0] sm:$0xff]
    %v162 = vld [vmem:[#allocation3 + $0xb8] sm:$0xff]
    %v163 = vld [vmem:[#allocation3 + $0xc0] sm:$0xff]
    %v164 = vld [vmem:[#allocation3 + $0xc8] sm:$0xff]
    %v165 = vld [vmem:[#allocation3 + $0xd0] sm:$0xff]
    %v166 = vld [vmem:[#allocation3 + $0xd8] sm:$0xff]
    %v167 = vld [vmem:[#allocation3 + $0xe0] sm:$0xff]
    %v168 = vld [vmem:[#allocation3 + $0xe8] sm:$0xff]
    %v169 = vld [vmem:[#allocation3 + $0xf0] sm:$0xff]
    %v170 = vld [vmem:[#allocation3 + $0xf8] sm:$0xff]
    %v171 = vld [vmem:[#allocation3 + $0x100] sm:$0xff]
    %v172 = vld [vmem:[#allocation3 + $0x108] sm:$0xff]
    %v173 = vld [vmem:[#allocation3 + $0x110] sm:$0xff]
    %v174 = vld [vmem:[#allocation3 + $0x118] sm:$0xff]
    %v175 = vld [vmem:[#allocation3 + $0x120] sm:$0xff]
    %v176 = vld [vmem:[#allocation3 + $0x128] sm:$0xff]
    %v177 = vld [vmem:[#allocation3 + $0x130] sm:$0xff]
    %v178 = vld [vmem:[#allocation3 + $0x138] sm:$0xff]
    %v179 = vld [vmem:[#allocation3 + $0x140] sm:$0xff]
    %v180 = vld [vmem:[#allocation3 + $0x148] sm:$0xff]
    %v181 = vld [vmem:[#allocation3 + $0x150] sm:$0xff]
    %v182 = vld [vmem:[#allocation3 + $0x158] sm:$0xff]
    %v183 = vld [vmem:[#allocation3 + $0x160] sm:$0xff]
    %v184 = vld [vmem:[#allocation3 + $0x168] sm:$0xff]
    %v185 = vld [vmem:[#allocation3 + $0x170] sm:$0xff]
    %v186 = vld [vmem:[#allocation3 + $0x178] sm:$0xff]
    %v187 = vld [vmem:[#allocation3 + $0x180] sm:$0xff]
    %v188 = vld [vmem:[#allocation3 + $0x188] sm:$0xff]
    %v189 = vld [vmem:[#allocation3 + $0x190] sm:$0xff]
    %v190 = vld [vmem:[#allocation3 + $0x198] sm:$0xff]
    %v191 = vld [vmem:[#allocation3 + $0x1a0] sm:$0xff]
    %v192 = vld [vmem:[#allocation3 + $0x1a8] sm:$0xff]
    %v193 = vld [vmem:[#allocation3 + $0x1b0] sm:$0xff]
    %v194 = vld [vmem:[#allocation3 + $0x1b8] sm:$0xff]
    %v195 = vld [vmem:[#allocation3 + $0x1c0] sm:$0xff]
    %v196 = vld [vmem:[#allocation3 + $0x1c8] sm:$0xff]
    %v197 = vld [vmem:[#allocation3 + $0x1d0] sm:$0xff]
    %v198 = vld [vmem:[#allocation3 + $0x1d8] sm:$0xff]
    %v199 = vld [vmem:[#allocation3 + $0x1e0] sm:$0xff]
    %v200 = vld [vmem:[#allocation3 + $0x1e8] sm:$0xff]
    %v201 = vld [vmem:[#allocation3 + $0x1f0] sm:$0xff]
    %v202 = vld [vmem:[#allocation3 + $0x1f8] sm:$0xff]
    %v203 = vld [vmem:[%s6] sm:$0x3]
    %v205 = vlaneseq
    %v206 = vshrl.u32 %v205, 7
    %v207 = vsub.s32 0, %v206
    %v208 = vrot.slane %v203, %v207
    %v209 = vlaneseq
    %v210 = vshrl.u32 %v209, 7
    %v211 = vsub.s32 1, %v210
    %v212 = vrot.slane %v203, %v211
    %215 = vmatprep.subr.mxu0 %v170
    %216 = vmatpush1.msra.mxu0 %v169
    %217 = vmatprep.subr.mxu0 %v168
    %218 = vmatpush1.msra.mxu0 %v167
    %219 = vmatprep.subr.mxu0 %v166
    %220 = vmatpush1.msra.mxu0 %v165
    %221 = vmatprep.subr.mxu0 %v164
    %222 = vmatpush1.msra.mxu0 %v163
    %223 = vmatprep.subr.mxu0 %v162
    %224 = vmatpush1.msra.mxu0 %v161
    %225 = vmatprep.subr.mxu0 %v160
    %226 = vmatpush1.msra.mxu0 %v159
    %227 = vmatprep.subr.mxu0 %v158
    %228 = vmatpush1.msra.mxu0 %v157
    %229 = vmatprep.subr.mxu0 %v156
    %230 = vmatpush1.msra.mxu0 %v155
    %231 = vmatprep.subr.mxu0 %v154
    %232 = vmatpush1.msra.mxu0 %v153
    %233 = vmatprep.subr.mxu0 %v152
    %234 = vmatpush1.msra.mxu0 %v151
    %235 = vmatprep.subr.mxu0 %v150
    %236 = vmatpush1.msra.mxu0 %v149
    %237 = vmatprep.subr.mxu0 %v148
    %238 = vmatpush1.msra.mxu0 %v147
    %239 = vmatprep.subr.mxu0 %v146
    %240 = vmatpush1.msra.mxu0 %v145
    %241 = vmatprep.subr.mxu0 %v144
    %242 = vmatpush1.msra.mxu0 %v143
    %243 = vmatprep.subr.mxu0 %v142
    %244 = vmatpush1.msra.mxu0 %v141
    %245 = vmatprep.subr.mxu0 %v140
    %246 = vmatpush1.msra.mxu0 %v139
    %247 = vmatprep.subr.mxu0 %v202
    %248 = vmatpush2.msra.mxu0 %v201
    %249 = vmatprep.subr.mxu0 %v200
    %250 = vmatpush2.msra.mxu0 %v199
    %251 = vmatprep.subr.mxu0 %v198
    %252 = vmatpush2.msra.mxu0 %v197
    %253 = vmatprep.subr.mxu0 %v196
    %254 = vmatpush2.msra.mxu0 %v195
    %255 = vmatprep.subr.mxu0 %v194
    %256 = vmatpush2.msra.mxu0 %v193
    %257 = vmatprep.subr.mxu0 %v192
    %258 = vmatpush2.msra.mxu0 %v191
    %259 = vmatprep.subr.mxu0 %v190
    %260 = vmatpush2.msra.mxu0 %v189
    %261 = vmatprep.subr.mxu0 %v188
    %262 = vmatpush2.msra.mxu0 %v187
    %263 = vmatprep.subr.mxu0 %v186
    %264 = vmatpush2.msra.mxu0 %v185
    %265 = vmatprep.subr.mxu0 %v184
    %266 = vmatpush2.msra.mxu0 %v183
    %267 = vmatprep.subr.mxu0 %v182
    %268 = vmatpush2.msra.mxu0 %v181
    %269 = vmatprep.subr.mxu0 %v180
    %270 = vmatpush2.msra.mxu0 %v179
    %271 = vmatprep.subr.mxu0 %v178
    %272 = vmatpush2.msra.mxu0 %v177
    %273 = vmatprep.subr.mxu0 %v176
    %274 = vmatpush2.msra.mxu0 %v175
    %275 = vmatprep.subr.mxu0 %v174
    %276 = vmatpush2.msra.mxu0 %v173
    %277 = vmatprep.subr.mxu0 %v172
    %278 = vmatpush2.msra.mxu0 %v171
    %279 = vmatprep.mubr.f32.mxu0 %v138
    %280 = vmatmul.mubr.f32.gmra.mxu0 %v137
    %v281 = vpop.f32.mrf.mxu0
    %v282 = vadd.f32 %v208, %v281
    %v283 = vpop.f32.mrf.mxu0
    %v284 = vadd.f32 %v212, %v283
    %285 = vdwg.mxu0
    %v286 = vmax.f32 %v282, 0.0
    %v287 = vmax.f32 %v284, 0.0
    %v288 = vld [vmem:[%s7] sm:$0x3]
    %v290 = vlaneseq
    %v291 = vshrl.u32 %v290, 7
    %v292 = vsub.s32 0, %v291
    %v293 = vrot.slane %v288, %v292
    %v294 = vlaneseq
    %v295 = vshrl.u32 %v294, 7
    %v296 = vsub.s32 1, %v295
    %v297 = vrot.slane %v288, %v296
    %v300 = vmul.f32 %v286, %v293
    %v301 = vmul.f32 %v287, %v297
    %v302 = vadd.f32 %v300, %v301
    %303 = vadd.xlane.f32.xlu0 %v302
    %v304 = vpop.xlane.xlu0 %303
    %s305 = sld [smem:[#allocation2]]
    %v306 = vstv %s305
    %v307 = vadd.f32 %v304, %v306
    %vm308 = vcmask 7168
    %309 = vst.msk [vmem:[%s9] sm:$0xff] %vm308, %v307
    // Predicated region
    $region42: #{critic_forward.1} parent=1 // pred_check
      _
    $region43: #{critic_forward.1} parent=1 // pred_check_branch
      %311 = sbr.rel (0) target = $region45
    $region44: #{critic_forward.1} parent=1 // pred_region
      _
    $region45: #{critic_forward.1} parent=1 // pred_fallthru
      _
    // Predicated region
    $region46: #{critic_forward.1} parent=1 // pred_check
      _
    $region47: #{critic_forward.1} parent=1 // pred_check_branch
      %313 = sbr.rel (0) target = $region49
    $region48: #{critic_forward.1} parent=1 // pred_region
      _
    $region49: #{critic_forward.1} parent=1 // pred_fallthru
      _
    %314 = vsyncpa [#allocation4], 1

</llo_original>
